<compile_context>
chip_gen: v6e
topology: v6e:2x2x1
jax: 0.10.0
libtpu: 0.0.40
codegen_flags: <defaults>
</compile_context>

<pallas_src>
import functools

import jax
import jax.numpy as jnp
from jax.experimental import pallas as pl
from jax.experimental.pallas import tpu as pltpu


_MIB = 1024 * 1024
_SMALL_VMEM_LIMIT = 5 * _MIB       # whole-problem-in-VMEM path threshold
_GENERAL_VMEM_BUDGET = 20 * _MIB   # per-step working-set target, general path
_VMEM_LIMIT_CAP = 40 * _MIB        # < v7x 64 MiB physical; fine on v5e/v6e


def _round_up(x, m):
    return (x + m - 1) // m * m


def _pad2(a, rows, cols):
    r, c = a.shape
    if r == rows and c == cols:
        return a
    return jnp.pad(a, ((0, rows - r), (0, cols - c)))


def _vmem_limit(estimate):
    return int(min(max(int(1.5 * estimate) + 2 * _MIB, 8 * _MIB), _VMEM_LIMIT_CAP))


def _divisor_tiles(full):
    cands = []
    for c in (full, 512, 256, 128):
        if c <= full and full % c == 0 and c not in cands:
            cands.append(c)
    return cands


# --------------------------------------------------------------------------- #
# Kernels
# --------------------------------------------------------------------------- #
def _fused_small_kernel(x_ref, w_ref, adj_ref, o_ref):
    # Whole problem resident in VMEM: both matmuls + tanh in one shot.
    xw = jnp.dot(x_ref[...], w_ref[...], preferred_element_type=jnp.float32)
    out = jnp.dot(adj_ref[...], xw.astype(jnp.bfloat16),
                  preferred_element_type=jnp.float32)
    o_ref[...] = jnp.tanh(out).astype(o_ref.dtype)


def _xw_kernel(x_ref, w_ref, o_ref):
    # xw = x @ weight (computed exactly once, bf16 result).
    o_ref[...] = jnp.dot(x_ref[...], w_ref[...],
                         preferred_element_type=jnp.float32).astype(o_ref.dtype)


def _adj_kernel_stripe(cnt_ref, ids_ref, adj_ref, xw_ref, o_ref, acc_ref, *,
                       tk, kmax):
    """out[i, j] = tanh(sum_k adj[i, ids[i,k]] @ xw_stripe[ids[i,k]])."""
    i = pl.program_id(1)
    k = pl.program_id(2)

    @pl.when(k == 0)
    def _():
        acc_ref[...] = jnp.zeros_like(acc_ref)

    @pl.when(k < cnt_ref[i])            # skip padded (repeated) block slots
    def _():
        kb = ids_ref[i * kmax + k]
        row = pl.multiple_of(kb * tk, tk)
        acc_ref[...] += jnp.dot(adj_ref[...], xw_ref[pl.ds(row, tk), :],
                                preferred_element_type=jnp.float32)

    @pl.when(k == pl.num_programs(2) - 1)
    def _():
        # tanh on the f32 accumulator (EUP slot), single cast on the way out.
        o_ref[...] = jnp.tanh(acc_ref[...]).astype(o_ref.dtype)


def _adj_kernel_stream(cnt_ref, ids_ref, adj_ref, xw_ref, o_ref, acc_ref):
    """Fallback when the xw j-stripe does not fit VMEM (xw streamed per block)."""
    i = pl.program_id(1)
    k = pl.program_id(2)

    @pl.when(k == 0)
    def _():
        acc_ref[...] = jnp.zeros_like(acc_ref)

    @pl.when(k < cnt_ref[i])
    def _():
        acc_ref[...] += jnp.dot(adj_ref[...], xw_ref[...],
                                preferred_element_type=jnp.float32)

    @pl.when(k == pl.num_programs(2) - 1)
    def _():
        o_ref[...] = jnp.tanh(acc_ref[...]).astype(o_ref.dtype)


# --------------------------------------------------------------------------- #
# Block-sparsity schedule (host / eager side)
# --------------------------------------------------------------------------- #
def _adj_block_schedule(ap, tm, tk):
    """Compacted per-row-block list of nonzero (tm, tk) adjacency blocks.

    Returns (counts[ni] i32, ids[ni*kmax] i32, kmax, nnz_blocks).  Slots at
    positions >= counts[i] repeat the last valid block id so consecutive grid
    steps keep the same block index (Pallas skips the DMA); the kernel's
    pl.when(k < counts[i]) guard keeps them out of the accumulator.
    Falls back to a dense schedule when adj is a tracer (inside jit).
    """
    np_r, np_c = ap.shape
    ni, nkb = np_r // tm, np_c // tk
    dense_counts = jnp.full((ni,), nkb, jnp.int32)
    dense_ids = jnp.tile(jnp.arange(nkb, dtype=jnp.int32)[None, :], (ni, 1))

    nz = jnp.any(ap.reshape(ni, tm, nkb, tk) != 0, axis=(1, 3))   # (ni, nkb)
    counts = jnp.sum(nz, axis=1).astype(jnp.int32)
    try:
        kmax = max(int(jnp.max(counts)), 1)
        nnz = max(int(jnp.sum(counts)), 1)
    except (jax.errors.ConcretizationTypeError, TypeError):
        return dense_counts, dense_ids.reshape(-1), nkb, ni * nkb

    if kmax >= nkb:   # no all-zero blocks: dense schedule (zero extra overhead)
        return dense_counts, dense_ids.reshape(-1), nkb, nnz

    # Nonzero block ids first (ascending), zero blocks pushed to the tail.
    keys = jnp.where(nz, 0, nkb) + jnp.arange(nkb, dtype=jnp.int32)[None, :]
    order = jnp.argsort(keys, axis=1).astype(jnp.int32)
    last = order[jnp.arange(ni), jnp.maximum(counts - 1, 0)]
    pos = jnp.arange(nkb, dtype=jnp.int32)[None, :]
    ids = jnp.where(pos < counts[:, None], order, last[:, None])[:, :kmax]
    return counts, ids.reshape(-1), kmax, nnz


# --------------------------------------------------------------------------- #
# Wrapper
# --------------------------------------------------------------------------- #
def graph_conv_sparse(x, weight, adj, *, tm=256, tk=256, out_dtype=None,
                      force_path=None):
    """tanh(adj @ (x @ weight)) — GraphConvSparse.forward as Pallas TPU kernels."""
    n, d_in = x.shape
    d_in2, d_out = weight.shape
    assert d_in == d_in2, (x.shape, weight.shape)
    assert adj.shape == (n, n), adj.shape
    out_dtype = out_dtype if out_dtype is not None else x.dtype
    out_bytes = jnp.dtype(out_dtype).itemsize

    # bf16 MXU operands; accumulation stays f32.  (xw is rounded to bf16 before
    # the adj matmul -> double rounding vs. the torch f32 reference; covered by
    # the 3e-2 tolerance.)
    xb = x.astype(jnp.bfloat16)
    wb = weight.astype(jnp.bfloat16)
    ab = adj.astype(jnp.bfloat16)

    # ---------- Small-graph path: everything in VMEM, no grid/pipeline. -----
    np_s = _round_up(n, 128)
    di_s = _round_up(d_in, 128)
    do_s = _round_up(d_out, 128)
    small_bytes = (2 * (np_s * di_s + di_s * do_s + np_s * np_s)   # bf16 inputs
                   + 4 * np_s * do_s                               # f32 xw
                   + 2 * np_s * do_s                               # bf16 xw copy
                   + 4 * np_s * do_s                               # f32 out temp
                   + out_bytes * np_s * do_s)                      # output
    use_small = (force_path == "small") or (
        force_path is None and small_bytes <= _SMALL_VMEM_LIMIT)

    if use_small:
        xp = _pad2(xb, np_s, di_s)
        wp = _pad2(wb, di_s, do_s)
        apd = _pad2(ab, np_s, np_s)
        out = pl.pallas_call(
            _fused_small_kernel,
            out_shape=jax.ShapeDtypeStruct((np_s, do_s), out_dtype),
            in_specs=[pl.BlockSpec(memory_space=pltpu.MemorySpace.VMEM)] * 3,
            out_specs=pl.BlockSpec(memory_space=pltpu.MemorySpace.VMEM),
            compiler_params=pltpu.CompilerParams(
                vmem_limit_bytes=_vmem_limit(small_bytes)),
            cost_estimate=pl.CostEstimate(
                flops=2 * np_s * di_s * do_s + 2 * np_s * np_s * do_s,
                transcendentals=np_s * do_s,
                bytes_accessed=small_bytes),
        )(xp, wp, apd)
        return out[:n, :d_out]

    # ---------- General path: block-sparse, tiled, pipelined. ----------------
    tm = min(tm, _round_up(n, 128))
    tk = min(tk, _round_up(n, 128))
    np_r = _round_up(n, tm)          # adj rows / output rows
    np_c = _round_up(n, tk)          # adj cols / x & xw rows (independent pad)
    di_p = _round_up(d_in, 128)
    do_p = _round_up(d_out, 128)

    xp = _pad2(xb, np_c, di_p)
    wp = _pad2(wb, di_p, do_p)
    apd = _pad2(ab, np_r, np_c)

    # ---- Step A: xw = x @ weight, computed once into a bf16 HBM buffer. ----
    tmx = tk                                     # divides np_c by construction
    tnx = 128
    for c in _divisor_tiles(do_p):
        if di_p * c * 2 <= 4 * _MIB:
            tnx = c
            break
    xw_est = (2 * tmx * di_p * 2 + 2 * di_p * tnx * 2
              + 2 * tmx * tnx * 2 + tmx * tnx * 4)
    xw = pl.pallas_call(
        _xw_kernel,
        out_shape=jax.ShapeDtypeStruct((np_c, do_p), jnp.bfloat16),
        grid_spec=pltpu.PrefetchScalarGridSpec(
            num_scalar_prefetch=0,
            grid=(np_c // tmx, do_p // tnx),
            in_specs=[pl.BlockSpec((tmx, di_p), lambda i, j: (i, 0)),
                      pl.BlockSpec((di_p, tnx), lambda i, j: (0, j))],
            out_specs=pl.BlockSpec((tmx, tnx), lambda i, j: (i, j)),
        ),
        compiler_params=pltpu.CompilerParams(
            dimension_semantics=("parallel", "parallel"),
            vmem_limit_bytes=_vmem_limit(xw_est)),
        cost_estimate=pl.CostEstimate(
            flops=2 * np_c * di_p * do_p,
            transcendentals=0,
            bytes_accessed=2 * (np_c * di_p + di_p * do_p * (np_c // tmx)
                                + np_c * do_p)),
    )(xp, wp)

    # ---- Step B: out = tanh(adj @ xw), block-sparse over adj blocks. --------
    counts, ids, kmax, nnz_blocks = _adj_block_schedule(apd, tm, tk)
    ni = np_r // tm

    def _step_b_est(tn_, stripe_):
        xw_b = 2 * (np_c * tn_ * 2) if stripe_ else 2 * (tk * tn_ * 2)
        return (2 * tm * tk * 2            # double-buffered adj tile (bf16)
                + 2 * tm * tn_ * out_bytes  # double-buffered output tile
                + tm * tn_ * 4              # f32 accumulator
                + tm * tn_ * 4              # f32 dot temporary
                + xw_b)                     # xw stripe or per-block tile

    # Prefer full output width (nj == 1) with a VMEM-resident xw stripe.
    tn, stripe = None, True
    for c in _divisor_tiles(do_p):
        if _step_b_est(c, True) <= _GENERAL_VMEM_BUDGET:
            tn, stripe = c, True
            break
    if tn is None:
        for c in _divisor_tiles(do_p):
            if _step_b_est(c, False) <= _GENERAL_VMEM_BUDGET:
                tn, stripe = c, False
                break
    if tn is None:
        tn, stripe = 128, False
    nj = do_p // tn

    if stripe:
        kern = functools.partial(_adj_kernel_stripe, tk=tk, kmax=kmax)
        # Constant block index across (i, k): the stripe is DMA'd once per j.
        xw_spec = pl.BlockSpec((np_c, tn), lambda j, i, k, cnt, ids_: (0, j))
    else:
        kern = _adj_kernel_stream
        xw_spec = pl.BlockSpec(
            (tk, tn), lambda j, i, k, cnt, ids_, km=kmax: (ids_[i * km + k], j))

    adj_spec = pl.BlockSpec(
        (tm, tk), lambda j, i, k, cnt, ids_, km=kmax: (i, ids_[i * km + k]))
    out_spec = pl.BlockSpec((tm, tn), lambda j, i, k, cnt, ids_: (i, j))

    bytes_xw = (np_c * tn * 2 * nj) if stripe else (nnz_blocks * tk * tn * 2 * nj)
    cost = pl.CostEstimate(
        flops=2 * nnz_blocks * tm * tk * tn * nj,
        transcendentals=np_r * do_p,
        bytes_accessed=(nnz_blocks * tm * tk * 2 * nj + bytes_xw
                        + np_r * do_p * out_bytes))

    out = pl.pallas_call(
        kern,
        out_shape=jax.ShapeDtypeStruct((np_r, do_p), out_dtype),
        grid_spec=pltpu.PrefetchScalarGridSpec(
            num_scalar_prefetch=2,
            grid=(nj, ni, kmax),
            in_specs=[adj_spec, xw_spec],
            out_specs=out_spec,
            scratch_shapes=[pltpu.VMEM((tm, tn), jnp.float32)],
        ),
        compiler_params=pltpu.CompilerParams(
            dimension_semantics=("parallel", "parallel", "arbitrary"),
            vmem_limit_bytes=_vmem_limit(_step_b_est(tn, stripe))),
        cost_estimate=cost,
    )(counts, ids, apd, xw)
    return out[:n, :d_out]


# --------------------------------------------------------------------------- #
# Demo / self-test
# --------------------------------------------------------------------------- #
if __name__ == "__main__":
    key = jax.random.PRNGKey(0)

    def make_problem(k, num_nodes, input_dim, output_dim, density=0.05):
        kx, kw, ka = jax.random.split(k, 3)
        x = jax.random.normal(kx, (num_nodes, input_dim), dtype=jnp.float32)
        # weight ~ Normal(0, 0.1), matching normal_init(input_dim, output_dim)
        w = 0.1 * jax.random.normal(kw, (input_dim, output_dim), dtype=jnp.float32)
        a = (jax.random.uniform(ka, (num_nodes, num_nodes)) < density).astype(jnp.float32)
        a = jnp.clip(a + a.T + jnp.eye(num_nodes, dtype=jnp.float32), 0.0, 1.0)
        adj = a / jnp.sum(a, axis=1, keepdims=True)
        return x, w, adj

    def make_block_diag_problem(k, block, nblocks, input_dim, output_dim, density=0.2):
        n = block * nblocks
        kx, kw, ka = jax.random.split(k, 3)
        x = jax.random.normal(kx, (n, input_dim), dtype=jnp.float32)
        w = 0.1 * jax.random.normal(kw, (input_dim, output_dim), dtype=jnp.float32)
        a = jnp.zeros((n, n), dtype=jnp.float32)
        for b, kb in enumerate(jax.random.split(ka, nblocks)):
            blk = (jax.random.uniform(kb, (block, block)) < density).astype(jnp.float32)
            a = a.at[b * block:(b + 1) * block, b * block:(b + 1) * block].set(blk)
        a = jnp.clip(a + a.T + jnp.eye(n, dtype=jnp.float32), 0.0, 1.0)
        adj = a / jnp.sum(a, axis=1, keepdims=True)
        return x, w, adj

    def check(out, x, w, adj):
        ref = jnp.tanh(adj @ (x @ w))
        assert out.shape == ref.shape, (out.shape, ref.shape)
        err = float(jnp.max(jnp.abs(out.astype(jnp.float32) - ref)))
        # bf16 MXU operands -> loosened tolerance vs. the f32 reference.
        assert bool(jnp.allclose(out.astype(jnp.float32), ref,
                                 atol=3e-2, rtol=3e-2)), f"max abs err {err}"

    k1, k2, k3 = jax.random.split(key, 3)

    # 1) Demo problem (auto-dispatch -> single whole-array fused kernel).
    x, w, adj = make_problem(k1, 256, 128, 128)
    out = jax.block_until_ready(graph_conv_sparse(x, w, adj))
    check(out, x, w, adj)

    # 2) Same data through the general (tiled + scalar-prefetch) path.
    out_g = jax.block_until_ready(graph_conv_sparse(x, w, adj, force_path="general"))
    check(out_g, x, w, adj)

    # 3) Ragged shapes: independent row/col padding, multi-block grid, nj=1.
    x2, w2, adj2 = make_problem(k2, 640, 96, 192)
    out2 = jax.block_until_ready(graph_conv_sparse(x2, w2, adj2, force_path="general"))
    check(out2, x2, w2, adj2)

    # 4) Block-structured adjacency: all-zero (tm, tk) adj blocks are skipped
    #    (kmax = 1 reduction step per row block instead of nkb = 3).
    x3, w3, adj3 = make_block_diag_problem(k3, 256, 3, 64, 128)
    out3 = jax.block_until_ready(graph_conv_sparse(x3, w3, adj3, force_path="general"))
    check(out3, x3, w3, adj3)

    print("KERNEL_OK")
</pallas_src>

<mosaic_0001>
module attributes {stable_mosaic.version = 11 : i64} {
  func.func @_fused_small_kernel(%arg0: memref<256x128xbf16, #tpu.memory_space<vmem>>, %arg1: memref<128x128xbf16, #tpu.memory_space<vmem>>, %arg2: memref<256x256xbf16, #tpu.memory_space<vmem>>, %arg3: memref<256x128xf32, #tpu.memory_space<vmem>>) attributes {dimension_semantics = [], scalar_prefetch = 0 : i64, scratch_operands = 0 : i64, tpu.core_type = #tpu.core_type<tc>} {
    %c0 = arith.constant 0 : index
    %c0_0 = arith.constant 0 : index
    %0 = vector.load %arg0[%c0, %c0_0] : memref<256x128xbf16, #tpu.memory_space<vmem>>, vector<256x128xbf16>
    %c0_1 = arith.constant 0 : index
    %c0_2 = arith.constant 0 : index
    %1 = vector.load %arg1[%c0_1, %c0_2] : memref<128x128xbf16, #tpu.memory_space<vmem>>, vector<128x128xbf16>
    %cst = arith.constant dense<0.000000e+00> : vector<256x128xf32>
    %2 = tpu.matmul %0, %1, %cst {dimension_numbers = #tpu.dot_dimension_numbers<[1], [0], [0], [1], [0, 0, 1, 1], [], []>} : vector<256x128xbf16>, vector<128x128xbf16>, vector<256x128xf32> -> vector<256x128xf32>
    %c0_3 = arith.constant 0 : index
    %c0_4 = arith.constant 0 : index
    %3 = vector.load %arg2[%c0_3, %c0_4] : memref<256x256xbf16, #tpu.memory_space<vmem>>, vector<256x256xbf16>
    %4 = arith.truncf %2 : vector<256x128xf32> to vector<256x128xbf16>
    %cst_5 = arith.constant dense<0.000000e+00> : vector<256x128xf32>
    %5 = tpu.matmul %3, %4, %cst_5 {dimension_numbers = #tpu.dot_dimension_numbers<[1], [0], [0], [1], [0, 0, 1, 1], [], []>} : vector<256x256xbf16>, vector<256x128xbf16>, vector<256x128xf32> -> vector<256x128xf32>
    %6 = math.tanh %5 : vector<256x128xf32>
    %c0_6 = arith.constant 0 : index
    %c0_7 = arith.constant 0 : index
    %7 = vector.load %arg3[%c0_6, %c0_7] : memref<256x128xf32, #tpu.memory_space<vmem>>, vector<256x128xf32>
    tpu.vector_store %arg3[%c0_6, %c0_7], %6 {strides = array<i32>} : memref<256x128xf32, #tpu.memory_space<vmem>>, vector<256x128xf32>,
    return
  }
}

</mosaic_0001>

<llo_original>
// kernel: tpu_custom_call.1
$region0: #{tpu_custom_call.1}
  #allocation0 [shape = 'u32[]', space=smem, size = 0x4, offset = 0x4, fixed_abs, tag = 'smem constant byte address 0x4 - core index']
  #allocation1 [shape = 'u32[144,128]{1,0:T(1,128)}', space=vmem, size = 0x12000, scoped, tag = 'internal scratch']
  %s0 = inlined_call_operand.hbm [shape: bf16[256,128], index: 0, kind: input, shape index: {}]
  %s1 = inlined_call_operand.hbm [shape: bf16[128,128], index: 1, kind: input, shape index: {}]
  %s2 = inlined_call_operand.hbm [shape: bf16[256,256], index: 2, kind: input, shape index: {}]
  %s3 = inlined_call_operand.hbm [shape: f32[256,128], index: 3, kind: output, shape index: {}]
  %s4 = sld [smem:[#allocation0]]
  $region34: #{tpu_custom_call.1} parent=0
    _
  %s6 = ssub.s32 1, %s4
  %s7 = scalar_select 0, %s6, %s4
  $region1: #{tpu_custom_call.1} parent=0
    #allocation2 [shape = 'u8[65536]{0}', space=vmem, size = 0x10000, scoped, tag = 'input window, operand 0, single buffered']
    #allocation3 [shape = 's32[1]{0}', space=sflag, size = 0x4, scoped, tag = 'scoped memory for tpu_custom_call.1']
    #allocation4 [shape = 's32[1]{0}', space=sflag, size = 0x4, scoped, tag = 'scoped memory for tpu_custom_call.1']
    #allocation5 [shape = 'u8[32768]{0}', space=vmem, size = 0x8000, scoped, tag = 'input window, operand 1, single buffered']
    #allocation6 [shape = 's32[1]{0}', space=sflag, size = 0x4, scoped, tag = 'scoped memory for tpu_custom_call.1']
    #allocation7 [shape = 'u8[131072]{0}', space=vmem, size = 0x20000, scoped, tag = 'input window, operand 2, single buffered']
    #allocation8 [shape = 'u8[131072]{0}', space=vmem, size = 0x20000, scoped, tag = 'output window, operand 0, single buffered']
    %8 = vsyncpa [#allocation3], 0
    %9 = vsyncpa [#allocation6], 0
    %10 = vsyncpa [#allocation4], 0
    // Predicated region
    $region2: #{tpu_custom_call.1} parent=1 // pred_check
      _
    $region3: #{tpu_custom_call.1} parent=1 // pred_check_branch
      %12 = sbr.rel (0) target = $region5
    $region4: #{tpu_custom_call.1} parent=1 // pred_region
      %s14 = ssub.s32 2048, 2048
      %15 = vsyncadd [#allocation3], %s14
      %s16 = sshll.u32 [#allocation2], 4
      %s17 = int_to_ptr.vmem [resolvable:$true] %s16
      %22 = dma.hbm_to_vmem [thread:$0]  %s0, 2048, %s17, [#allocation3], 64, 64, 4
    $region5: #{tpu_custom_call.1} parent=1 // pred_fallthru
      _
    // Predicated region
    $region6: #{tpu_custom_call.1} parent=1 // pred_check
      _
    $region7: #{tpu_custom_call.1} parent=1 // pred_check_branch
      %24 = sbr.rel (0) target = $region9
    $region8: #{tpu_custom_call.1} parent=1 // pred_region
      %s26 = ssub.s32 1024, 1024
      %27 = vsyncadd [#allocation6], %s26
      %s28 = sshll.u32 [#allocation5], 4
      %s29 = int_to_ptr.vmem [resolvable:$true] %s28
      %34 = dma.hbm_to_vmem [thread:$0]  %s1, 1024, %s29, [#allocation6], 64, 64, 4
    $region9: #{tpu_custom_call.1} parent=1 // pred_fallthru
      _
    // Predicated region
    $region10: #{tpu_custom_call.1} parent=1 // pred_check
      _
    $region11: #{tpu_custom_call.1} parent=1 // pred_check_branch
      %36 = sbr.rel (0) target = $region13
    $region12: #{tpu_custom_call.1} parent=1 // pred_region
      %s38 = ssub.s32 4096, 4096
      %39 = vsyncadd [#allocation6], %s38
      %s40 = sshll.u32 [#allocation7], 4
      %s41 = int_to_ptr.vmem [resolvable:$true] %s40
      %46 = dma.hbm_to_vmem [thread:$0]  %s2, 4096, %s41, [#allocation6], 128, 128, 8
    $region13: #{tpu_custom_call.1} parent=1 // pred_fallthru
      _
    // Predicated region
    $region14: #{tpu_custom_call.1} parent=1 // pred_check
      _
    $region15: #{tpu_custom_call.1} parent=1 // pred_check_branch
      %48 = sbr.rel (0) target = $region17
    $region16: #{tpu_custom_call.1} parent=1 // pred_region
      %49 = dma.done [#allocation3], 2048
    $region17: #{tpu_custom_call.1} parent=1 // pred_fallthru
      _
    // Predicated region
    $region18: #{tpu_custom_call.1} parent=1 // pred_check
      _
    $region19: #{tpu_custom_call.1} parent=1 // pred_check_branch
      %51 = sbr.rel (0) target = $region21
    $region20: #{tpu_custom_call.1} parent=1 // pred_region
      %52 = dma.done [#allocation6], 1024
    $region21: #{tpu_custom_call.1} parent=1 // pred_fallthru
      _
    // Predicated region
    $region22: #{tpu_custom_call.1} parent=1 // pred_check
      _
    $region23: #{tpu_custom_call.1} parent=1 // pred_check_branch
      %54 = sbr.rel (0) target = $region25
    $region24: #{tpu_custom_call.1} parent=1 // pred_region
      %55 = dma.done [#allocation6], 4096
    $region25: #{tpu_custom_call.1} parent=1 // pred_fallthru
      _
    %v57 = vld [vmem:[#allocation2] sm:$0xf]
    %v58 = vld [vmem:[#allocation2 + $0x4] sm:$0xf]
    %v59 = vld [vmem:[#allocation2 + $0x8] sm:$0xf]
    %v60 = vld [vmem:[#allocation2 + $0xc] sm:$0xf]
    %v61 = vld [vmem:[#allocation2 + $0x10] sm:$0xf]
    %v62 = vld [vmem:[#allocation2 + $0x14] sm:$0xf]
    %v63 = vld [vmem:[#allocation2 + $0x18] sm:$0xf]
    %v64 = vld [vmem:[#allocation2 + $0x1c] sm:$0xf]
    %v65 = vld [vmem:[#allocation2 + $0x20] sm:$0xf]
    %v66 = vld [vmem:[#allocation2 + $0x24] sm:$0xf]
    %v67 = vld [vmem:[#allocation2 + $0x28] sm:$0xf]
    %v68 = vld [vmem:[#allocation2 + $0x2c] sm:$0xf]
    %v69 = vld [vmem:[#allocation2 + $0x30] sm:$0xf]
    %v70 = vld [vmem:[#allocation2 + $0x34] sm:$0xf]
    %v71 = vld [vmem:[#allocation2 + $0x38] sm:$0xf]
    %v72 = vld [vmem:[#allocation2 + $0x3c] sm:$0xf]
    %v73 = vld [vmem:[#allocation2 + $0x40] sm:$0xf]
    %v74 = vld [vmem:[#allocation2 + $0x44] sm:$0xf]
    %v75 = vld [vmem:[#allocation2 + $0x48] sm:$0xf]
    %v76 = vld [vmem:[#allocation2 + $0x4c] sm:$0xf]
    %v77 = vld [vmem:[#allocation2 + $0x50] sm:$0xf]
    %v78 = vld [vmem:[#allocation2 + $0x54] sm:$0xf]
    %v79 = vld [vmem:[#allocation2 + $0x58] sm:$0xf]
    %v80 = vld [vmem:[#allocation2 + $0x5c] sm:$0xf]
    %v81 = vld [vmem:[#allocation2 + $0x60] sm:$0xf]
    %v82 = vld [vmem:[#allocation2 + $0x64] sm:$0xf]
    %v83 = vld [vmem:[#allocation2 + $0x68] sm:$0xf]
    %v84 = vld [vmem:[#allocation2 + $0x6c] sm:$0xf]
    %v85 = vld [vmem:[#allocation2 + $0x70] sm:$0xf]
    %v86 = vld [vmem:[#allocation2 + $0x74] sm:$0xf]
    %v87 = vld [vmem:[#allocation2 + $0x78] sm:$0xf]
    %v88 = vld [vmem:[#allocation2 + $0x7c] sm:$0xf]
    %v89 = vld [vmem:[#allocation5] sm:$0xf]
    %v90 = vld [vmem:[#allocation5 + $0x4] sm:$0xf]
    %v91 = vld [vmem:[#allocation5 + $0x8] sm:$0xf]
    %v92 = vld [vmem:[#allocation5 + $0xc] sm:$0xf]
    %v93 = vld [vmem:[#allocation5 + $0x10] sm:$0xf]
    %v94 = vld [vmem:[#allocation5 + $0x14] sm:$0xf]
    %v95 = vld [vmem:[#allocation5 + $0x18] sm:$0xf]
    %v96 = vld [vmem:[#allocation5 + $0x1c] sm:$0xf]
    %v97 = vld [vmem:[#allocation5 + $0x20] sm:$0xf]
    %v98 = vld [vmem:[#allocation5 + $0x24] sm:$0xf]
    %v99 = vld [vmem:[#allocation5 + $0x28] sm:$0xf]
    %v100 = vld [vmem:[#allocation5 + $0x2c] sm:$0xf]
    %v101 = vld [vmem:[#allocation5 + $0x30] sm:$0xf]
    %v102 = vld [vmem:[#allocation5 + $0x34] sm:$0xf]
    %v103 = vld [vmem:[#allocation5 + $0x38] sm:$0xf]
    %v104 = vld [vmem:[#allocation5 + $0x3c] sm:$0xf]
    %v137 = vunpack.c.l.b16 %v57
    %v138 = vunpack.c.l.b16 %v58
    %v139 = vunpack.c.l.b16 %v59
    %v140 = vunpack.c.l.b16 %v60
    %v141 = vunpack.c.l.b16 %v61
    %v142 = vunpack.c.l.b16 %v62
    %v143 = vunpack.c.l.b16 %v63
    %v144 = vunpack.c.l.b16 %v64
    %v145 = vunpack.c.l.b16 %v65
    %v146 = vunpack.c.l.b16 %v66
    %v147 = vunpack.c.l.b16 %v67
    %v148 = vunpack.c.l.b16 %v68
    %v149 = vunpack.c.l.b16 %v69
    %v150 = vunpack.c.l.b16 %v70
    %v151 = vunpack.c.l.b16 %v71
    %v152 = vunpack.c.l.b16 %v72
    %v153 = vunpack.c.l.b16 %v73
    %v154 = vunpack.c.l.b16 %v74
    %v155 = vunpack.c.l.b16 %v75
    %v156 = vunpack.c.l.b16 %v76
    %v157 = vunpack.c.l.b16 %v77
    %v158 = vunpack.c.l.b16 %v78
    %v159 = vunpack.c.l.b16 %v79
    %v160 = vunpack.c.l.b16 %v80
    %v161 = vunpack.c.l.b16 %v81
    %v162 = vunpack.c.l.b16 %v82
    %v163 = vunpack.c.l.b16 %v83
    %v164 = vunpack.c.l.b16 %v84
    %v165 = vunpack.c.l.b16 %v85
    %v166 = vunpack.c.l.b16 %v86
    %v167 = vunpack.c.l.b16 %v87
    %v168 = vunpack.c.l.b16 %v88
    %v169 = vpack.c.b16 %v138, %v137
    %v170 = vpack.c.b16 %v140, %v139
    %v171 = vpack.c.b16 %v142, %v141
    %v172 = vpack.c.b16 %v144, %v143
    %v173 = vpack.c.b16 %v146, %v145
    %v174 = vpack.c.b16 %v148, %v147
    %v175 = vpack.c.b16 %v150, %v149
    %v176 = vpack.c.b16 %v152, %v151
    %v177 = vpack.c.b16 %v154, %v153
    %v178 = vpack.c.b16 %v156, %v155
    %v179 = vpack.c.b16 %v158, %v157
    %v180 = vpack.c.b16 %v160, %v159
    %v181 = vpack.c.b16 %v162, %v161
    %v182 = vpack.c.b16 %v164, %v163
    %v183 = vpack.c.b16 %v166, %v165
    %v184 = vpack.c.b16 %v168, %v167
    %v217 = vunpack.c.l.b16 %v89
    %v218 = vunpack.c.l.b16 %v90
    %v219 = vunpack.c.l.b16 %v91
    %v220 = vunpack.c.l.b16 %v92
    %v221 = vunpack.c.l.b16 %v93
    %v222 = vunpack.c.l.b16 %v94
    %v223 = vunpack.c.l.b16 %v95
    %v224 = vunpack.c.l.b16 %v96
    %v225 = vunpack.c.l.b16 %v97
    %v226 = vunpack.c.l.b16 %v98
    %v227 = vunpack.c.l.b16 %v99
    %v228 = vunpack.c.l.b16 %v100
    %v229 = vunpack.c.l.b16 %v101
    %v230 = vunpack.c.l.b16 %v102
    %v231 = vunpack.c.l.b16 %v103
    %v232 = vunpack.c.l.b16 %v104
    %v233 = vpack.c.b16 %v218, %v217
    %v234 = vpack.c.b16 %v220, %v219
    %v235 = vpack.c.b16 %v222, %v221
    %v236 = vpack.c.b16 %v224, %v223
    %v237 = vpack.c.b16 %v226, %v225
    %v238 = vpack.c.b16 %v228, %v227
    %v239 = vpack.c.b16 %v230, %v229
    %v240 = vpack.c.b16 %v232, %v231
    %249 = vmatprep.subr.bf16.mxu0 0
    %250 = vmatpush1.bf16.msra.mxu0 %v240
    %251 = vmatprep.subr.bf16.mxu0 0
    %252 = vmatpush1.bf16.msra.mxu0 %v239
    %253 = vmatprep.subr.bf16.mxu0 0
    %254 = vmatpush1.bf16.msra.mxu0 %v238
    %255 = vmatprep.subr.bf16.mxu0 0
    %256 = vmatpush1.bf16.msra.mxu0 %v237
    %257 = vmatprep.subr.bf16.mxu0 0
    %258 = vmatpush1.bf16.msra.mxu0 %v236
    %259 = vmatprep.subr.bf16.mxu0 0
    %260 = vmatpush1.bf16.msra.mxu0 %v235
    %261 = vmatprep.subr.bf16.mxu0 0
    %262 = vmatpush1.bf16.msra.mxu0 %v234
    %263 = vmatprep.subr.bf16.mxu0 0
    %264 = vmatpush1.bf16.msra.mxu0 %v233
    %265 = vmatprep.subr.bf16.mxu0 0
    %266 = vmatpush2.bf16.msra.mxu0 0
    %267 = vmatprep.subr.bf16.mxu0 0
    %268 = vmatpush2.bf16.msra.mxu0 0
    %269 = vmatprep.subr.bf16.mxu0 0
    %270 = vmatpush2.bf16.msra.mxu0 0
    %271 = vmatprep.subr.bf16.mxu0 0
    %272 = vmatpush2.bf16.msra.mxu0 0
    %273 = vmatprep.subr.bf16.mxu0 0
    %274 = vmatpush2.bf16.msra.mxu0 0
    %275 = vmatprep.subr.bf16.mxu0 0
    %276 = vmatpush2.bf16.msra.mxu0 0
    %277 = vmatprep.subr.bf16.mxu0 0
    %278 = vmatpush2.bf16.msra.mxu0 0
    %279 = vmatprep.subr.bf16.mxu0 0
    %280 = vmatpush2.bf16.msra.mxu0 0
    %281 = vmatprep.mubr.bf16.mxu0 0
    %282 = vmatmul.mubr.bf16.gmra.mxu0 %v169
    %v283 = vpop.f32.mrf.mxu0
    %v284 = vadd.f32 0.0, %v283
    %v285 = vpop.f32.mrf.mxu0
    %v286 = vpop.f32.mrf.mxu0
    %v287 = vadd.f32 0.0, %v286
    %v288 = vpop.f32.mrf.mxu0
    %289 = vmatprep.mubr.bf16.mxu0 0
    %290 = vmatmul.mubr.bf16.gmra.mxu0 %v170
    %v291 = vpop.f32.mrf.mxu0
    %v292 = vadd.f32 0.0, %v291
    %v293 = vpop.f32.mrf.mxu0
    %v294 = vpop.f32.mrf.mxu0
    %v295 = vadd.f32 0.0, %v294
    %v296 = vpop.f32.mrf.mxu0
    %297 = vmatprep.mubr.bf16.mxu0 0
    %298 = vmatmul.mubr.bf16.gmra.mxu0 %v171
    %v299 = vpop.f32.mrf.mxu0
    %v300 = vadd.f32 0.0, %v299
    %v301 = vpop.f32.mrf.mxu0
    %v302 = vpop.f32.mrf.mxu0
    %v303 = vadd.f32 0.0, %v302
    %v304 = vpop.f32.mrf.mxu0
    %305 = vmatprep.mubr.bf16.mxu0 0
    %306 = vmatmul.mubr.bf16.gmra.mxu0 %v172
    %v307 = vpop.f32.mrf.mxu0
    %v308 = vadd.f32 0.0, %v307
    %v309 = vpop.f32.mrf.mxu0
    %v310 = vpop.f32.mrf.mxu0
    %v311 = vadd.f32 0.0, %v310
    %v312 = vpop.f32.mrf.mxu0
    %313 = vmatprep.mubr.bf16.mxu0 0
    %314 = vmatmul.mubr.bf16.gmra.mxu0 %v173
    %v315 = vpop.f32.mrf.mxu0
    %v316 = vadd.f32 0.0, %v315
    %v317 = vpop.f32.mrf.mxu0
    %v318 = vpop.f32.mrf.mxu0
    %v319 = vadd.f32 0.0, %v318
    %v320 = vpop.f32.mrf.mxu0
    %321 = vmatprep.mubr.bf16.mxu0 0
    %322 = vmatmul.mubr.bf16.gmra.mxu0 %v174
    %v323 = vpop.f32.mrf.mxu0
    %v324 = vadd.f32 0.0, %v323
    %v325 = vpop.f32.mrf.mxu0
    %v326 = vpop.f32.mrf.mxu0
    %v327 = vadd.f32 0.0, %v326
    %v328 = vpop.f32.mrf.mxu0
    %329 = vmatprep.mubr.bf16.mxu0 0
    %330 = vmatmul.mubr.bf16.gmra.mxu0 %v175
    %v331 = vpop.f32.mrf.mxu0
    %v332 = vadd.f32 0.0, %v331
    %v333 = vpop.f32.mrf.mxu0
    %v334 = vpop.f32.mrf.mxu0
    %v335 = vadd.f32 0.0, %v334
    %v336 = vpop.f32.mrf.mxu0
    %337 = vmatprep.mubr.bf16.mxu0 0
    %338 = vmatmul.mubr.bf16.gmra.mxu0 %v176
    %v339 = vpop.f32.mrf.mxu0
    %v340 = vadd.f32 0.0, %v339
    %v341 = vpop.f32.mrf.mxu0
    %v342 = vpop.f32.mrf.mxu0
    %v343 = vadd.f32 0.0, %v342
    %v344 = vpop.f32.mrf.mxu0
    %345 = vmatprep.mubr.bf16.mxu0 0
    %346 = vmatmul.mubr.bf16.gmra.mxu0 %v177
    %v347 = vpop.f32.mrf.mxu0
    %v348 = vadd.f32 0.0, %v347
    %v349 = vpop.f32.mrf.mxu0
    %v350 = vpop.f32.mrf.mxu0
    %v351 = vadd.f32 0.0, %v350
    %v352 = vpop.f32.mrf.mxu0
    %353 = vmatprep.mubr.bf16.mxu0 0
    %354 = vmatmul.mubr.bf16.gmra.mxu0 %v178
    %v355 = vpop.f32.mrf.mxu0
    %v356 = vadd.f32 0.0, %v355
    %v357 = vpop.f32.mrf.mxu0
    %v358 = vpop.f32.mrf.mxu0
    %v359 = vadd.f32 0.0, %v358
    %v360 = vpop.f32.mrf.mxu0
    %361 = vmatprep.mubr.bf16.mxu0 0
    %362 = vmatmul.mubr.bf16.gmra.mxu0 %v179
    %v363 = vpop.f32.mrf.mxu0
    %v364 = vadd.f32 0.0, %v363
    %v365 = vpop.f32.mrf.mxu0
    %v366 = vpop.f32.mrf.mxu0
    %v367 = vadd.f32 0.0, %v366
    %v368 = vpop.f32.mrf.mxu0
    %369 = vmatprep.mubr.bf16.mxu0 0
    %370 = vmatmul.mubr.bf16.gmra.mxu0 %v180
    %v371 = vpop.f32.mrf.mxu0
    %v372 = vadd.f32 0.0, %v371
    %v373 = vpop.f32.mrf.mxu0
    %v374 = vpop.f32.mrf.mxu0
    %v375 = vadd.f32 0.0, %v374
    %v376 = vpop.f32.mrf.mxu0
    %377 = vmatprep.mubr.bf16.mxu0 0
    %378 = vmatmul.mubr.bf16.gmra.mxu0 %v181
    %v379 = vpop.f32.mrf.mxu0
    %v380 = vadd.f32 0.0, %v379
    %v381 = vpop.f32.mrf.mxu0
    %v382 = vpop.f32.mrf.mxu0
    %v383 = vadd.f32 0.0, %v382
    %v384 = vpop.f32.mrf.mxu0
    %385 = vmatprep.mubr.bf16.mxu0 0
    %386 = vmatmul.mubr.bf16.gmra.mxu0 %v182
    %v387 = vpop.f32.mrf.mxu0
    %v388 = vadd.f32 0.0, %v387
    %v389 = vpop.f32.mrf.mxu0
    %v390 = vpop.f32.mrf.mxu0
    %v391 = vadd.f32 0.0, %v390
    %v392 = vpop.f32.mrf.mxu0
    %393 = vmatprep.mubr.bf16.mxu0 0
    %394 = vmatmul.mubr.bf16.gmra.mxu0 %v183
    %v395 = vpop.f32.mrf.mxu0
    %v396 = vadd.f32 0.0, %v395
    %v397 = vpop.f32.mrf.mxu0
    %v398 = vpop.f32.mrf.mxu0
    %v399 = vadd.f32 0.0, %v398
    %v400 = vpop.f32.mrf.mxu0
    %401 = vmatprep.mubr.bf16.mxu0 0
    %402 = vmatmul.mubr.bf16.gmra.mxu0 %v184
    %v403 = vpop.f32.mrf.mxu0
    %v404 = vadd.f32 0.0, %v403
    %v405 = vpop.f32.mrf.mxu0
    %v406 = vpop.f32.mrf.mxu0
    %v407 = vadd.f32 0.0, %v406
    %v408 = vpop.f32.mrf.mxu0
    %409 = vdwg.mxu0
    %v410 = vld [vmem:[#allocation7] sm:$0xff]
    %v411 = vld [vmem:[#allocation7 + $0x8] sm:$0xff]
    %v412 = vld [vmem:[#allocation7 + $0x10] sm:$0xff]
    %v413 = vld [vmem:[#allocation7 + $0x18] sm:$0xff]
    %v414 = vld [vmem:[#allocation7 + $0x20] sm:$0xff]
    %v415 = vld [vmem:[#allocation7 + $0x28] sm:$0xff]
    %v416 = vld [vmem:[#allocation7 + $0x30] sm:$0xff]
    %v417 = vld [vmem:[#allocation7 + $0x38] sm:$0xff]
    %v418 = vld [vmem:[#allocation7 + $0x40] sm:$0xff]
    %v419 = vld [vmem:[#allocation7 + $0x48] sm:$0xff]
    %v420 = vld [vmem:[#allocation7 + $0x50] sm:$0xff]
    %v421 = vld [vmem:[#allocation7 + $0x58] sm:$0xff]
    %v422 = vld [vmem:[#allocation7 + $0x60] sm:$0xff]
    %v423 = vld [vmem:[#allocation7 + $0x68] sm:$0xff]
    %v424 = vld [vmem:[#allocation7 + $0x70] sm:$0xff]
    %v425 = vld [vmem:[#allocation7 + $0x78] sm:$0xff]
    %v426 = vld [vmem:[#allocation7 + $0x80] sm:$0xff]
    %v427 = vld [vmem:[#allocation7 + $0x88] sm:$0xff]
    %v428 = vld [vmem:[#allocation7 + $0x90] sm:$0xff]
    %v429 = vld [vmem:[#allocation7 + $0x98] sm:$0xff]
    %v430 = vld [vmem:[#allocation7 + $0xa0] sm:$0xff]
    %v431 = vld [vmem:[#allocation7 + $0xa8] sm:$0xff]
    %v432 = vld [vmem:[#allocation7 + $0xb0] sm:$0xff]
    %v433 = vld [vmem:[#allocation7 + $0xb8] sm:$0xff]
    %v434 = vld [vmem:[#allocation7 + $0xc0] sm:$0xff]
    %v435 = vld [vmem:[#allocation7 + $0xc8] sm:$0xff]
    %v436 = vld [vmem:[#allocation7 + $0xd0] sm:$0xff]
    %v437 = vld [vmem:[#allocation7 + $0xd8] sm:$0xff]
    %v438 = vld [vmem:[#allocation7 + $0xe0] sm:$0xff]
    %v439 = vld [vmem:[#allocation7 + $0xe8] sm:$0xff]
    %v440 = vld [vmem:[#allocation7 + $0xf0] sm:$0xff]
    %v441 = vld [vmem:[#allocation7 + $0xf8] sm:$0xff]
    %v442 = vpack.c.bf16 %v287, %v284
    %v443 = vpack.c.bf16 %v295, %v292
    %v444 = vpack.c.bf16 %v303, %v300
    %v445 = vpack.c.bf16 %v311, %v308
    %v446 = vpack.c.bf16 %v319, %v316
    %v447 = vpack.c.bf16 %v327, %v324
    %v448 = vpack.c.bf16 %v335, %v332
    %v449 = vpack.c.bf16 %v343, %v340
    %v450 = vpack.c.bf16 %v351, %v348
    %v451 = vpack.c.bf16 %v359, %v356
    %v452 = vpack.c.bf16 %v367, %v364
    %v453 = vpack.c.bf16 %v375, %v372
    %v454 = vpack.c.bf16 %v383, %v380
    %v455 = vpack.c.bf16 %v391, %v388
    %v456 = vpack.c.bf16 %v399, %v396
    %v457 = vpack.c.bf16 %v407, %v404
    %v490 = vunpack.c.l.b16 %v410
    %v491 = vunpack.c.h.b16 %v410
    %v492 = vunpack.c.l.b16 %v411
    %v493 = vunpack.c.h.b16 %v411
    %v494 = vunpack.c.l.b16 %v412
    %v495 = vunpack.c.h.b16 %v412
    %v496 = vunpack.c.l.b16 %v413
    %v497 = vunpack.c.h.b16 %v413
    %v498 = vunpack.c.l.b16 %v414
    %v499 = vunpack.c.h.b16 %v414
    %v500 = vunpack.c.l.b16 %v415
    %v501 = vunpack.c.h.b16 %v415
    %v502 = vunpack.c.l.b16 %v416
    %v503 = vunpack.c.h.b16 %v416
    %v504 = vunpack.c.l.b16 %v417
    %v505 = vunpack.c.h.b16 %v417
    %v506 = vunpack.c.l.b16 %v418
    %v507 = vunpack.c.h.b16 %v418
    %v508 = vunpack.c.l.b16 %v419
    %v509 = vunpack.c.h.b16 %v419
    %v510 = vunpack.c.l.b16 %v420
    %v511 = vunpack.c.h.b16 %v420
    %v512 = vunpack.c.l.b16 %v421
    %v513 = vunpack.c.h.b16 %v421
    %v514 = vunpack.c.l.b16 %v422
    %v515 = vunpack.c.h.b16 %v422
    %v516 = vunpack.c.l.b16 %v423
    %v517 = vunpack.c.h.b16 %v423
    %v518 = vunpack.c.l.b16 %v424
    %v519 = vunpack.c.h.b16 %v424
    %v520 = vunpack.c.l.b16 %v425
    %v521 = vunpack.c.h.b16 %v425
    %v522 = vunpack.c.l.b16 %v426
    %v523 = vunpack.c.h.b16 %v426
    %v524 = vunpack.c.l.b16 %v427
    %v525 = vunpack.c.h.b16 %v427
    %v526 = vunpack.c.l.b16 %v428
    %v527 = vunpack.c.h.b16 %v428
    %v528 = vunpack.c.l.b16 %v429
    %v529 = vunpack.c.h.b16 %v429
    %v530 = vunpack.c.l.b16 %v430
    %v531 = vunpack.c.h.b16 %v430
    %v532 = vunpack.c.l.b16 %v431
    %v533 = vunpack.c.h.b16 %v431
    %v534 = vunpack.c.l.b16 %v432
    %v535 = vunpack.c.h.b16 %v432
    %v536 = vunpack.c.l.b16 %v433
    %v537 = vunpack.c.h.b16 %v433
    %v538 = vunpack.c.l.b16 %v434
    %v539 = vunpack.c.h.b16 %v434
    %v540 = vunpack.c.l.b16 %v435
    %v541 = vunpack.c.h.b16 %v435
    %v542 = vunpack.c.l.b16 %v436
    %v543 = vunpack.c.h.b16 %v436
    %v544 = vunpack.c.l.b16 %v437
    %v545 = vunpack.c.h.b16 %v437
    %v546 = vunpack.c.l.b16 %v438
    %v547 = vunpack.c.h.b16 %v438
    %v548 = vunpack.c.l.b16 %v439
    %v549 = vunpack.c.h.b16 %v439
    %v550 = vunpack.c.l.b16 %v440
    %v551 = vunpack.c.h.b16 %v440
    %v552 = vunpack.c.l.b16 %v441
    %v553 = vunpack.c.h.b16 %v441
    %v554 = vpack.c.b16 %v492, %v490
    %v555 = vpack.c.b16 %v493, %v491
    %v556 = vpack.c.b16 %v496, %v494
    %v557 = vpack.c.b16 %v497, %v495
    %v558 = vpack.c.b16 %v500, %v498
    %v559 = vpack.c.b16 %v501, %v499
    %v560 = vpack.c.b16 %v504, %v502
    %v561 = vpack.c.b16 %v505, %v503
    %v562 = vpack.c.b16 %v508, %v506
    %v563 = vpack.c.b16 %v509, %v507
    %v564 = vpack.c.b16 %v512, %v510
    %v565 = vpack.c.b16 %v513, %v511
    %v566 = vpack.c.b16 %v516, %v514
    %v567 = vpack.c.b16 %v517, %v515
    %v568 = vpack.c.b16 %v520, %v518
    %v569 = vpack.c.b16 %v521, %v519
    %v570 = vpack.c.b16 %v524, %v522
    %v571 = vpack.c.b16 %v525, %v523
    %v572 = vpack.c.b16 %v528, %v526
    %v573 = vpack.c.b16 %v529, %v527
    %v574 = vpack.c.b16 %v532, %v530
    %v575 = vpack.c.b16 %v533, %v531
    %v576 = vpack.c.b16 %v536, %v534
    %v577 = vpack.c.b16 %v537, %v535
    %v578 = vpack.c.b16 %v540, %v538
    %v579 = vpack.c.b16 %v541, %v539
    %v580 = vpack.c.b16 %v544, %v542
    %v581 = vpack.c.b16 %v545, %v543
    %v582 = vpack.c.b16 %v548, %v546
    %v583 = vpack.c.b16 %v549, %v547
    %v584 = vpack.c.b16 %v552, %v550
    %v585 = vpack.c.b16 %v553, %v551
    %618 = vmatprep.subr.bf16.mxu0 0
    %619 = vmatpush1.bf16.msra.mxu0 %v449
    %620 = vmatprep.subr.bf16.mxu0 0
    %621 = vmatpush1.bf16.msra.mxu0 %v448
    %622 = vmatprep.subr.bf16.mxu0 0
    %623 = vmatpush1.bf16.msra.mxu0 %v447
    %624 = vmatprep.subr.bf16.mxu0 0
    %625 = vmatpush1.bf16.msra.mxu0 %v446
    %626 = vmatprep.subr.bf16.mxu0 0
    %627 = vmatpush1.bf16.msra.mxu0 %v445
    %628 = vmatprep.subr.bf16.mxu0 0
    %629 = vmatpush1.bf16.msra.mxu0 %v444
    %630 = vmatprep.subr.bf16.mxu0 0
    %631 = vmatpush1.bf16.msra.mxu0 %v443
    %632 = vmatprep.subr.bf16.mxu0 0
    %633 = vmatpush1.bf16.msra.mxu0 %v442
    %634 = vmatprep.subr.bf16.mxu0 0
    %635 = vmatpush2.bf16.msra.mxu0 %v457
    %636 = vmatprep.subr.bf16.mxu0 0
    %637 = vmatpush2.bf16.msra.mxu0 %v456
    %638 = vmatprep.subr.bf16.mxu0 0
    %639 = vmatpush2.bf16.msra.mxu0 %v455
    %640 = vmatprep.subr.bf16.mxu0 0
    %641 = vmatpush2.bf16.msra.mxu0 %v454
    %642 = vmatprep.subr.bf16.mxu0 0
    %643 = vmatpush2.bf16.msra.mxu0 %v453
    %644 = vmatprep.subr.bf16.mxu0 0
    %645 = vmatpush2.bf16.msra.mxu0 %v452
    %646 = vmatprep.subr.bf16.mxu0 0
    %647 = vmatpush2.bf16.msra.mxu0 %v451
    %648 = vmatprep.subr.bf16.mxu0 0
    %649 = vmatpush2.bf16.msra.mxu0 %v450
    %650 = vmatprep.mubr.bf16.mxu0 %v555
    %651 = vmatmul.mubr.bf16.gmra.mxu0 %v554
    %v652 = vpop.f32.mrf.mxu0
    %v653 = vadd.f32 0.0, %v652
    %v654 = vpop.f32.mrf.mxu0
    %v655 = vpop.f32.mrf.mxu0
    %v656 = vadd.f32 0.0, %v655
    %v657 = vpop.f32.mrf.mxu0
    %658 = vmatprep.mubr.bf16.mxu0 %v557
    %659 = vmatmul.mubr.bf16.gmra.mxu0 %v556
    %v660 = vpop.f32.mrf.mxu0
    %v661 = vadd.f32 0.0, %v660
    %v662 = vpop.f32.mrf.mxu0
    %v663 = vpop.f32.mrf.mxu0
    %v664 = vadd.f32 0.0, %v663
    %v665 = vpop.f32.mrf.mxu0
    %666 = vmatprep.mubr.bf16.mxu0 %v559
    %667 = vmatmul.mubr.bf16.gmra.mxu0 %v558
    %v668 = vpop.f32.mrf.mxu0
    %v669 = vadd.f32 0.0, %v668
    %v670 = vpop.f32.mrf.mxu0
    %v671 = vpop.f32.mrf.mxu0
    %v672 = vadd.f32 0.0, %v671
    %v673 = vpop.f32.mrf.mxu0
    %674 = vmatprep.mubr.bf16.mxu0 %v561
    %675 = vmatmul.mubr.bf16.gmra.mxu0 %v560
    %v676 = vpop.f32.mrf.mxu0
    %v677 = vadd.f32 0.0, %v676
    %v678 = vpop.f32.mrf.mxu0
    %v679 = vpop.f32.mrf.mxu0
    %v680 = vadd.f32 0.0, %v679
    %v681 = vpop.f32.mrf.mxu0
    %682 = vmatprep.mubr.bf16.mxu0 %v563
    %683 = vmatmul.mubr.bf16.gmra.mxu0 %v562
    %v684 = vpop.f32.mrf.mxu0
    %v685 = vadd.f32 0.0, %v684
    %v686 = vpop.f32.mrf.mxu0
    %v687 = vpop.f32.mrf.mxu0
    %v688 = vadd.f32 0.0, %v687
    %v689 = vpop.f32.mrf.mxu0
    %690 = vmatprep.mubr.bf16.mxu0 %v565
    %691 = vmatmul.mubr.bf16.gmra.mxu0 %v564
    %v692 = vpop.f32.mrf.mxu0
    %v693 = vadd.f32 0.0, %v692
    %v694 = vpop.f32.mrf.mxu0
    %v695 = vpop.f32.mrf.mxu0
    %v696 = vadd.f32 0.0, %v695
    %v697 = vpop.f32.mrf.mxu0
    %698 = vmatprep.mubr.bf16.mxu0 %v567
    %699 = vmatmul.mubr.bf16.gmra.mxu0 %v566
    %v700 = vpop.f32.mrf.mxu0
    %v701 = vadd.f32 0.0, %v700
    %v702 = vpop.f32.mrf.mxu0
    %v703 = vpop.f32.mrf.mxu0
    %v704 = vadd.f32 0.0, %v703
    %v705 = vpop.f32.mrf.mxu0
    %706 = vmatprep.mubr.bf16.mxu0 %v569
    %707 = vmatmul.mubr.bf16.gmra.mxu0 %v568
    %v708 = vpop.f32.mrf.mxu0
    %v709 = vadd.f32 0.0, %v708
    %v710 = vpop.f32.mrf.mxu0
    %v711 = vpop.f32.mrf.mxu0
    %v712 = vadd.f32 0.0, %v711
    %v713 = vpop.f32.mrf.mxu0
    %714 = vmatprep.mubr.bf16.mxu0 %v571
    %715 = vmatmul.mubr.bf16.gmra.mxu0 %v570
    %v716 = vpop.f32.mrf.mxu0
    %v717 = vadd.f32 0.0, %v716
    %v718 = vpop.f32.mrf.mxu0
    %v719 = vpop.f32.mrf.mxu0
    %v720 = vadd.f32 0.0, %v719
    %v721 = vpop.f32.mrf.mxu0
    %722 = vmatprep.mubr.bf16.mxu0 %v573
    %723 = vmatmul.mubr.bf16.gmra.mxu0 %v572
    %v724 = vpop.f32.mrf.mxu0
    %v725 = vadd.f32 0.0, %v724
    %v726 = vpop.f32.mrf.mxu0
    %v727 = vpop.f32.mrf.mxu0
    %v728 = vadd.f32 0.0, %v727
    %v729 = vpop.f32.mrf.mxu0
    %730 = vmatprep.mubr.bf16.mxu0 %v575
    %731 = vmatmul.mubr.bf16.gmra.mxu0 %v574
    %v732 = vpop.f32.mrf.mxu0
    %v733 = vadd.f32 0.0, %v732
    %v734 = vpop.f32.mrf.mxu0
    %v735 = vpop.f32.mrf.mxu0
    %v736 = vadd.f32 0.0, %v735
    %v737 = vpop.f32.mrf.mxu0
    %738 = vmatprep.mubr.bf16.mxu0 %v577
    %739 = vmatmul.mubr.bf16.gmra.mxu0 %v576
    %v740 = vpop.f32.mrf.mxu0
    %v741 = vadd.f32 0.0, %v740
    %v742 = vpop.f32.mrf.mxu0
    %v743 = vpop.f32.mrf.mxu0
    %v744 = vadd.f32 0.0, %v743
    %v745 = vpop.f32.mrf.mxu0
    %746 = vmatprep.mubr.bf16.mxu0 %v579
    %747 = vmatmul.mubr.bf16.gmra.mxu0 %v578
    %v748 = vpop.f32.mrf.mxu0
    %v749 = vadd.f32 0.0, %v748
    %v750 = vpop.f32.mrf.mxu0
    %v751 = vpop.f32.mrf.mxu0
    %v752 = vadd.f32 0.0, %v751
    %v753 = vpop.f32.mrf.mxu0
    %754 = vmatprep.mubr.bf16.mxu0 %v581
    %755 = vmatmul.mubr.bf16.gmra.mxu0 %v580
    %v756 = vpop.f32.mrf.mxu0
    %v757 = vadd.f32 0.0, %v756
    %v758 = vpop.f32.mrf.mxu0
    %v759 = vpop.f32.mrf.mxu0
    %v760 = vadd.f32 0.0, %v759
    %v761 = vpop.f32.mrf.mxu0
    %762 = vmatprep.mubr.bf16.mxu0 %v583
    %763 = vmatmul.mubr.bf16.gmra.mxu0 %v582
    %v764 = vpop.f32.mrf.mxu0
    %v765 = vadd.f32 0.0, %v764
    %v766 = vpop.f32.mrf.mxu0
    %v767 = vpop.f32.mrf.mxu0
    %v768 = vadd.f32 0.0, %v767
    %v769 = vpop.f32.mrf.mxu0
    %770 = vmatprep.mubr.bf16.mxu0 %v585
    %771 = vmatmul.mubr.bf16.gmra.mxu0 %v584
    %v772 = vpop.f32.mrf.mxu0
    %v773 = vadd.f32 0.0, %v772
    %v774 = vpop.f32.mrf.mxu0
    %v775 = vpop.f32.mrf.mxu0
    %v776 = vadd.f32 0.0, %v775
    %v777 = vpop.f32.mrf.mxu0
    %778 = vdwg.mxu0
    %v779 = vtanh.pop %v653
    %v780 = vtanh.pop %v656
    %v781 = vtanh.pop %v661
    %v782 = vtanh.pop %v664
    %v783 = vtanh.pop %v669
    %v784 = vtanh.pop %v672
    %v785 = vtanh.pop %v677
    %v786 = vtanh.pop %v680
    %v787 = vtanh.pop %v685
    %v788 = vtanh.pop %v688
    %v789 = vtanh.pop %v693
    %v790 = vtanh.pop %v696
    %v791 = vtanh.pop %v701
    %v792 = vtanh.pop %v704
    %v793 = vtanh.pop %v709
    %v794 = vtanh.pop %v712
    %v795 = vtanh.pop %v717
    %v796 = vtanh.pop %v720
    %v797 = vtanh.pop %v725
    %v798 = vtanh.pop %v728
    %v799 = vtanh.pop %v733
    %v800 = vtanh.pop %v736
    %v801 = vtanh.pop %v741
    %v802 = vtanh.pop %v744
    %v803 = vtanh.pop %v749
    %v804 = vtanh.pop %v752
    %v805 = vtanh.pop %v757
    %v806 = vtanh.pop %v760
    %v807 = vtanh.pop %v765
    %v808 = vtanh.pop %v768
    %v809 = vtanh.pop %v773
    %v810 = vtanh.pop %v776
    %811 = vst [vmem:[#allocation8] sm:$0xff] %v779
    %812 = vst [vmem:[#allocation8 + $0x8] sm:$0xff] %v780
    %813 = vst [vmem:[#allocation8 + $0x10] sm:$0xff] %v781
    %814 = vst [vmem:[#allocation8 + $0x18] sm:$0xff] %v782
    %815 = vst [vmem:[#allocation8 + $0x20] sm:$0xff] %v783
    %816 = vst [vmem:[#allocation8 + $0x28] sm:$0xff] %v784
    %817 = vst [vmem:[#allocation8 + $0x30] sm:$0xff] %v785
    %818 = vst [vmem:[#allocation8 + $0x38] sm:$0xff] %v786
    %819 = vst [vmem:[#allocation8 + $0x40] sm:$0xff] %v787
    %820 = vst [vmem:[#allocation8 + $0x48] sm:$0xff] %v788
    %821 = vst [vmem:[#allocation8 + $0x50] sm:$0xff] %v789
    %822 = vst [vmem:[#allocation8 + $0x58] sm:$0xff] %v790
    %823 = vst [vmem:[#allocation8 + $0x60] sm:$0xff] %v791
    %824 = vst [vmem:[#allocation8 + $0x68] sm:$0xff] %v792
    %825 = vst [vmem:[#allocation8 + $0x70] sm:$0xff] %v793
    %826 = vst [vmem:[#allocation8 + $0x78] sm:$0xff] %v794
    %827 = vst [vmem:[#allocation8 + $0x80] sm:$0xff] %v795
    %828 = vst [vmem:[#allocation8 + $0x88] sm:$0xff] %v796
    %829 = vst [vmem:[#allocation8 + $0x90] sm:$0xff] %v797
    %830 = vst [vmem:[#allocation8 + $0x98] sm:$0xff] %v798
    %831 = vst [vmem:[#allocation8 + $0xa0] sm:$0xff] %v799
    %832 = vst [vmem:[#allocation8 + $0xa8] sm:$0xff] %v800
    %833 = vst [vmem:[#allocation8 + $0xb0] sm:$0xff] %v801
    %834 = vst [vmem:[#allocation8 + $0xb8] sm:$0xff] %v802
    %835 = vst [vmem:[#allocation8 + $0xc0] sm:$0xff] %v803
    %836 = vst [vmem:[#allocation8 + $0xc8] sm:$0xff] %v804
    %837 = vst [vmem:[#allocation8 + $0xd0] sm:$0xff] %v805
    %838 = vst [vmem:[#allocation8 + $0xd8] sm:$0xff] %v806
    %839 = vst [vmem:[#allocation8 + $0xe0] sm:$0xff] %v807
    %840 = vst [vmem:[#allocation8 + $0xe8] sm:$0xff] %v808
    %841 = vst [vmem:[#allocation8 + $0xf0] sm:$0xff] %v809
    %842 = vst [vmem:[#allocation8 + $0xf8] sm:$0xff] %v810
    // Predicated region
    $region26: #{tpu_custom_call.1} parent=1 // pred_check
      _
    $region27: #{tpu_custom_call.1} parent=1 // pred_check_branch
      %844 = sbr.rel (0) target = $region29
    $region28: #{tpu_custom_call.1} parent=1 // pred_region
      %s846 = ssub.s32 4096, 4096
      %847 = vsyncadd [#allocation4], %s846
      %s848 = sshll.u32 [#allocation8], 4
      %s849 = int_to_ptr.vmem [resolvable:$true] %s848
      %854 = dma.vmem_to_hbm [thread:$0]  %s849, 4096, %s3, [#allocation4], 128, 128, 8
    $region29: #{tpu_custom_call.1} parent=1 // pred_fallthru
      _
    // Predicated region
    $region30: #{tpu_custom_call.1} parent=1 // pred_check
      _
    $region31: #{tpu_custom_call.1} parent=1 // pred_check_branch
      %856 = sbr.rel (0) target = $region33
    $region32: #{tpu_custom_call.1} parent=1 // pred_region
      %857 = dma.done [#allocation4], 4096
    $region33: #{tpu_custom_call.1} parent=1 // pred_fallthru
      _
    %858 = vsyncpa [#allocation3], 1
    %859 = vsyncpa [#allocation6], 1
    %860 = vsyncpa [#allocation4], 1

</llo_original>
